<compile_context>
chip_gen: v7x
topology: tpu7x:2x2x1
jax: 0.10.0
libtpu: 0.0.40
codegen_flags: <defaults>
</compile_context>

<pallas_src>
import jax
import jax.numpy as jnp
from jax.experimental import pallas as pl
from jax.experimental.pallas import tpu as pltpu

NUM_CATEGORIES = 65
NUM_DOMAINS = 4
LANE = 128                       # packed class axis: [0:65]=cat, [65:69]=dom
MAX_TB = 512                     # rows per grid step (multiple of 8)


def _voting_kernel(w_ref, p_ref, out_ref):
    # w_ref: [3, 1, 128] vote weights, p_ref: [3, TB, 128] stacked probs.
    # One explicit broadcast of the stacked weight slab (no per-term
    # broadcast_in_dim), then a multiply + sum over the leading (major) axis —
    # lowered as two elementwise FMAs on full (8,128) vregs.
    w = jnp.broadcast_to(w_ref[...], p_ref.shape)
    out_ref[...] = jnp.sum(w * p_ref[...], axis=0)


def element_weight_voting(category_probs, domain_probs, params):
    """category_probs / domain_probs: tuples of 3 arrays [B,65] / [B,4]."""
    c = jnp.stack(category_probs, axis=0).astype(jnp.float32)   # [3, B, 65]
    d = jnp.stack(domain_probs, axis=0).astype(jnp.float32)     # [3, B, 4]
    B = c.shape[1]

    # Batch tiling: pad to a multiple of 8 (sublane), tile at most MAX_TB rows.
    b_pad8 = max(8, ((B + 7) // 8) * 8)
    tb = min(b_pad8, MAX_TB)
    b_pad = ((b_pad8 + tb - 1) // tb) * tb
    n_blocks = b_pad // tb

    # Pack probs into one lane-dense slab [3, B_pad, 128].
    probs = jnp.zeros((3, b_pad, LANE), jnp.float32)
    probs = probs.at[:, :B, :NUM_CATEGORIES].set(c)
    probs = probs.at[:, :B, NUM_CATEGORIES:NUM_CATEGORIES + NUM_DOMAINS].set(d)

    # Pack the 6 weight vectors into one [3, 1, 128] slab.
    wc = jnp.stack([params["arrCWeight_0"], params["arrCWeight_1"],
                    params["arrCWeight_2"]], axis=0)             # [3, 1, 65]
    wd = jnp.stack([params["arrDWeight_0"], params["arrDWeight_1"],
                    params["arrDWeight_2"]], axis=0)             # [3, 1, 4]
    weights = jnp.zeros((3, 1, LANE), jnp.float32)
    weights = weights.at[:, :, :NUM_CATEGORIES].set(wc)
    weights = weights.at[:, :, NUM_CATEGORIES:NUM_CATEGORIES + NUM_DOMAINS].set(wd)

    out = pl.pallas_call(
        _voting_kernel,
        out_shape=jax.ShapeDtypeStruct((b_pad, LANE), jnp.float32),
        grid_spec=pltpu.PrefetchScalarGridSpec(
            num_scalar_prefetch=0,
            grid=(n_blocks,),
            in_specs=[
                # Weights: full block, resident across the whole grid.
                pl.BlockSpec((3, 1, LANE), lambda i: (0, 0, 0)),
                # Probs: tile over batch only.
                pl.BlockSpec((3, tb, LANE), lambda i: (0, i, 0)),
            ],
            out_specs=pl.BlockSpec((tb, LANE), lambda i: (i, 0)),
        ),
        compiler_params=pltpu.CompilerParams(
            dimension_semantics=("parallel",)),
    )(weights, probs)

    sum_c = out[:B, :NUM_CATEGORIES]
    sum_d = out[:B, NUM_CATEGORIES:NUM_CATEGORIES + NUM_DOMAINS]
    return sum_c, sum_d


def init_params():
    """Deterministic init mirroring Model.__init__ (all vote weights = 1.0)."""
    p = {
        "scalarWeight_0": jnp.array(1.0, jnp.float32),   # unused in forward
        "scalarWeight_1": jnp.array(1.0, jnp.float32),   # unused in forward
        "scalarWeight_2": jnp.array(1.0, jnp.float32),   # unused in forward
        "arrCWeight_0": jnp.ones((1, NUM_CATEGORIES), jnp.float32),
        "arrCWeight_1": jnp.ones((1, NUM_CATEGORIES), jnp.float32),
        "arrCWeight_2": jnp.ones((1, NUM_CATEGORIES), jnp.float32),
        "arrDWeight_0": jnp.ones((1, NUM_DOMAINS), jnp.float32),
        "arrDWeight_1": jnp.ones((1, NUM_DOMAINS), jnp.float32),
        "arrDWeight_2": jnp.ones((1, NUM_DOMAINS), jnp.float32),
    }
    # CLinear / DLinear exist in the module but are never used in forward.
    p["CLinear_w"] = jnp.zeros((NUM_CATEGORIES, NUM_CATEGORIES), jnp.float32)
    p["CLinear_b"] = jnp.zeros((NUM_CATEGORIES,), jnp.float32)
    p["DLinear_w"] = jnp.zeros((NUM_DOMAINS, NUM_DOMAINS), jnp.float32)
    p["DLinear_b"] = jnp.zeros((NUM_DOMAINS,), jnp.float32)
    return p


if __name__ == "__main__":
    key = jax.random.PRNGKey(0)
    B = 8
    keys = jax.random.split(key, 6)
    category_probs = tuple(
        jax.nn.softmax(
            jax.random.normal(keys[i], (B, NUM_CATEGORIES), jnp.float32), axis=-1)
        for i in range(3))
    domain_probs = tuple(
        jax.nn.softmax(
            jax.random.normal(keys[3 + i], (B, NUM_DOMAINS), jnp.float32), axis=-1)
        for i in range(3))

    params = init_params()

    sum_c, sum_d = element_weight_voting(category_probs, domain_probs, params)
    jax.block_until_ready((sum_c, sum_d))

    # Reference check (pure JAX, matches Model.forward exactly).
    ref_c = (params["arrCWeight_0"] * category_probs[0]
             + params["arrCWeight_1"] * category_probs[1]
             + params["arrCWeight_2"] * category_probs[2])
    ref_d = (params["arrDWeight_0"] * domain_probs[0]
             + params["arrDWeight_1"] * domain_probs[1]
             + params["arrDWeight_2"] * domain_probs[2])
    assert sum_c.shape == (B, NUM_CATEGORIES)
    assert sum_d.shape == (B, NUM_DOMAINS)
    assert jnp.allclose(sum_c, ref_c, atol=1e-6), "category voting mismatch"
    assert jnp.allclose(sum_d, ref_d, atol=1e-6), "domain voting mismatch"

    print("KERNEL_OK")
</pallas_src>

<mosaic_0001>
module attributes {stable_mosaic.version = 11 : i64} {
  func.func @_voting_kernel(%arg0: i32, %arg1: memref<3x1x128xf32, #tpu.memory_space<vmem>>, %arg2: memref<3x8x128xf32, #tpu.memory_space<vmem>>, %arg3: memref<8x128xf32, #tpu.memory_space<vmem>>) attributes {dimension_semantics = [#tpu.dimension_semantics<parallel>], iteration_bounds = array<i64: 1>, scalar_prefetch = 0 : i64, scratch_operands = 0 : i64, tpu.core_type = #tpu.core_type<tc>, window_params = [{pipeline_mode = #tpu.pipeline_mode<synchronous>, transform_indices = @transform_0, window_bounds = array<i64: 3, 1, 128>}, {transform_indices = @transform_1, window_bounds = array<i64: 3, 8, 128>}, {transform_indices = @transform_2, window_bounds = array<i64: 8, 128>}]} {
    %c0 = arith.constant 0 : index
    %c0_0 = arith.constant 0 : index
    %c0_1 = arith.constant 0 : index
    %0 = vector.load %arg1[%c0, %c0_0, %c0_1] : memref<3x1x128xf32, #tpu.memory_space<vmem>>, vector<3x1x128xf32>
    %1 = vector.shape_cast %0 : vector<3x1x128xf32> to vector<3x1x128xf32>
    %2 = vector.broadcast %1 : vector<3x1x128xf32> to vector<3x8x128xf32>
    %c0_2 = arith.constant 0 : index
    %c0_3 = arith.constant 0 : index
    %c0_4 = arith.constant 0 : index
    %3 = vector.load %arg2[%c0_2, %c0_3, %c0_4] : memref<3x8x128xf32, #tpu.memory_space<vmem>>, vector<3x8x128xf32>
    %4 = arith.mulf %2, %3 : vector<3x8x128xf32>
    %cst = arith.constant dense<0.000000e+00> : vector<8x128xf32>
    %5 = vector.multi_reduction <add>, %4, %cst [0] : vector<3x8x128xf32> to vector<8x128xf32>
    %c0_5 = arith.constant 0 : index
    %c0_6 = arith.constant 0 : index
    %6 = vector.load %arg3[%c0_5, %c0_6] : memref<8x128xf32, #tpu.memory_space<vmem>>, vector<8x128xf32>
    tpu.vector_store %arg3[%c0_5, %c0_6], %5 {strides = array<i32>} : memref<8x128xf32, #tpu.memory_space<vmem>>, vector<8x128xf32>,
    return
  }
  func.func @transform_0(%arg0: i32) -> (i32, i32, i32) {
    %c0_i32 = arith.constant 0 : i32
    %c0_i32_0 = arith.constant 0 : i32
    %c0_i32_1 = arith.constant 0 : i32
    %c0_i32_2 = arith.constant 0 : i32
    return %c0_i32, %c0_i32_0, %c0_i32_1 : i32, i32, i32
  }
  func.func @transform_1(%arg0: i32) -> (i32, i32, i32) {
    %c0_i32 = arith.constant 0 : i32
    %c0_i32_0 = arith.constant 0 : i32
    %c0_i32_1 = arith.constant 0 : i32
    return %c0_i32, %arg0, %c0_i32_0 : i32, i32, i32
  }
  func.func @transform_2(%arg0: i32) -> (i32, i32) {
    %c0_i32 = arith.constant 0 : i32
    %c0_i32_0 = arith.constant 0 : i32
    return %arg0, %c0_i32 : i32, i32
  }
}

</mosaic_0001>

<llo_original>
// kernel: tpu_custom_call.1
$region0: #{tpu_custom_call.1}
  #allocation0 [shape = 'u32[]', space=smem, size = 0x4, offset = 0x4, fixed_abs, tag = 'smem constant byte address 0x4 - core index']
  #allocation1 [shape = 'u32[144,128]{1,0:T(1,128)}', space=vmem, size = 0x12000, scoped, tag = 'internal scratch']
  %s0 = inlined_call_operand.hbm [shape: f32[3,1,128], index: 0, kind: input, shape index: {}]
  %s1 = inlined_call_operand.hbm [shape: f32[3,8,128], index: 1, kind: input, shape index: {}]
  %s2 = inlined_call_operand.hbm [shape: f32[8,128], index: 2, kind: output, shape index: {}]
  %s3 = sld [smem:[#allocation0]]
  $region26: #{tpu_custom_call.1} parent=0
    _
  %s5 = ssub.s32 1, %s3
  %s6 = scalar_select 0, %s5, %s3
  $region1: #{tpu_custom_call.1} parent=0
    #allocation2 [shape = 'u8[1536]{0}', space=vmem, size = 0x800, scoped, tag = 'input window, operand 0, single buffered']
    #allocation3 [shape = 's32[1]{0}', space=sflag, size = 0x4, scoped, tag = 'scoped memory for tpu_custom_call.1']
    #allocation4 [shape = 's32[1]{0}', space=sflag, size = 0x4, scoped, tag = 'scoped memory for tpu_custom_call.1']
    #allocation5 [shape = 'u8[12288]{0}', space=vmem, size = 0x3000, scoped, tag = 'input window, operand 1, single buffered']
    #allocation6 [shape = 's32[1]{0}', space=sflag, size = 0x4, scoped, tag = 'scoped memory for tpu_custom_call.1']
    #allocation7 [shape = 'u8[4096]{0}', space=vmem, size = 0x1000, scoped, tag = 'output window, operand 0, single buffered']
    %7 = vsyncpa [#allocation3], 0
    %8 = vsyncpa [#allocation6], 0
    %9 = vsyncpa [#allocation4], 0
    // Predicated region
    $region2: #{tpu_custom_call.1} parent=1 // pred_check
      _
    $region3: #{tpu_custom_call.1} parent=1 // pred_check_branch
      %11 = sbr.rel (0) target = $region5
    $region4: #{tpu_custom_call.1} parent=1 // pred_region
      %s13 = ssub.s32 48, 48
      %14 = vsyncadd [#allocation3], %s13
      %s15 = sshll.u32 [#allocation2], 4
      %s16 = int_to_ptr.vmem [resolvable:$true] %s15
      %21 = dma.hbm_to_vmem [thread:$0]  %s0, 48, %s16, [#allocation3], 16, 16, 1
    $region5: #{tpu_custom_call.1} parent=1 // pred_fallthru
      _
    // Predicated region
    $region6: #{tpu_custom_call.1} parent=1 // pred_check
      _
    $region7: #{tpu_custom_call.1} parent=1 // pred_check_branch
      %23 = sbr.rel (0) target = $region9
    $region8: #{tpu_custom_call.1} parent=1 // pred_region
      %s25 = ssub.s32 384, 384
      %26 = vsyncadd [#allocation6], %s25
      %s27 = sshll.u32 [#allocation5], 4
      %s28 = int_to_ptr.vmem [resolvable:$true] %s27
      %33 = dma.hbm_to_vmem [thread:$0]  %s1, 384, %s28, [#allocation6], 128, 128, 8
    $region9: #{tpu_custom_call.1} parent=1 // pred_fallthru
      _
    // Predicated region
    $region10: #{tpu_custom_call.1} parent=1 // pred_check
      _
    $region11: #{tpu_custom_call.1} parent=1 // pred_check_branch
      %35 = sbr.rel (0) target = $region13
    $region12: #{tpu_custom_call.1} parent=1 // pred_region
      %36 = dma.done [#allocation3], 48
    $region13: #{tpu_custom_call.1} parent=1 // pred_fallthru
      _
    // Predicated region
    $region14: #{tpu_custom_call.1} parent=1 // pred_check
      _
    $region15: #{tpu_custom_call.1} parent=1 // pred_check_branch
      %38 = sbr.rel (0) target = $region17
    $region16: #{tpu_custom_call.1} parent=1 // pred_region
      %39 = dma.done [#allocation6], 384
    $region17: #{tpu_custom_call.1} parent=1 // pred_fallthru
      _
    %v40 = vld [vmem:[#allocation2] sm:$0x1]
    %v41 = vld [vmem:[#allocation2 + $0x1] sm:$0x1]
    %v42 = vld [vmem:[#allocation2 + $0x2] sm:$0x1]
    %v46 = vlaneseq
    %v47 = vshrl.u32 %v46, 7
    %v48 = vsub.s32 0, %v47
    %v49 = vrot.slane %v40, %v48
    %v50 = vlaneseq
    %v51 = vshrl.u32 %v50, 7
    %v52 = vsub.s32 0, %v51
    %v53 = vrot.slane %v41, %v52
    %v54 = vlaneseq
    %v55 = vshrl.u32 %v54, 7
    %v56 = vsub.s32 0, %v55
    %v57 = vrot.slane %v42, %v56
    %v61 = vld [vmem:[#allocation5] sm:$0xff]
    %v62 = vld [vmem:[#allocation5 + $0x8] sm:$0xff]
    %v63 = vld [vmem:[#allocation5 + $0x10] sm:$0xff]
    %v64 = vmul.f32 %v49, %v61
    %v65 = vmul.f32 %v53, %v62
    %v66 = vmul.f32 %v57, %v63
    %v67 = vadd.f32 %v64, %v65
    %v68 = vadd.f32 %v67, %v66
    %69 = vst [vmem:[#allocation7] sm:$0xff] %v68
    // Predicated region
    $region18: #{tpu_custom_call.1} parent=1 // pred_check
      _
    $region19: #{tpu_custom_call.1} parent=1 // pred_check_branch
      %71 = sbr.rel (0) target = $region21
    $region20: #{tpu_custom_call.1} parent=1 // pred_region
      %s73 = ssub.s32 128, 128
      %74 = vsyncadd [#allocation4], %s73
      %s76 = sshll.u32 [#allocation7], 4
      %s77 = int_to_ptr.vmem [resolvable:$true] %s76
      %79 = dma.vmem_to_hbm [thread:$0]  %s77, 128, %s2, [#allocation4]
    $region21: #{tpu_custom_call.1} parent=1 // pred_fallthru
      _
    // Predicated region
    $region22: #{tpu_custom_call.1} parent=1 // pred_check
      _
    $region23: #{tpu_custom_call.1} parent=1 // pred_check_branch
      %81 = sbr.rel (0) target = $region25
    $region24: #{tpu_custom_call.1} parent=1 // pred_region
      %82 = dma.done [#allocation4], 128
    $region25: #{tpu_custom_call.1} parent=1 // pred_fallthru
      _
    %83 = vsyncpa [#allocation3], 1
    %84 = vsyncpa [#allocation6], 1
    %85 = vsyncpa [#allocation4], 1

</llo_original>
